<compile_context>
chip_gen: v7x
topology: tpu7x:2x2x1
jax: 0.10.0
libtpu: 0.0.40
codegen_flags: <defaults>
</compile_context>

<pallas_src>
import functools

import jax
import jax.numpy as jnp
from jax.experimental import pallas as pl
from jax.experimental.pallas import tpu as pltpu


# --------------------------------------------------------------------------- kernel
def _criterion_kernel(hw_total, compute_dtype, w_ref, pm_ref, gm_ref, ps_ref,
                      gs_ref, out_ref, acc_ref):
    """Grid = (batch, spatial_chunks).  Tiles:
         pm_ref : (M, r_blk, lanes)  mask logits, all candidates (dense sublanes)
         gm_ref : (r_blk, lanes)     ground-truth mask chunk (fetched once, bcast over M)
         ps_ref : (M, D)             predicted semantic embeddings
         gs_ref : (1, D)             target semantic embedding
         out_ref: (1, 3)             [min_total, mask@argmin, sem@argmin]
         acc_ref: (M, 1) f32         running BCE sum per candidate
    """
    h = pl.program_id(1)
    nh = pl.num_programs(1)

    @pl.when(h == 0)
    def _init():
        acc_ref[...] = jnp.zeros_like(acc_ref)

    # ---- loss_fn #1: mask BCE-with-logits, partial sums for this spatial chunk.
    x = pm_ref[...].astype(compute_dtype)            # (M, r_blk, lanes)
    t = gm_ref[...].astype(compute_dtype)            # (r_blk, lanes)
    # numerically-stable BCE with logits (== F.binary_cross_entropy_with_logits)
    bce = (jnp.maximum(x, 0.0) - x * t[None, :, :]
           + jnp.log1p(jnp.exp(-jnp.abs(x))))        # (M, r_blk, lanes)
    part = jnp.sum(bce.astype(jnp.float32), axis=-1, keepdims=True)   # (M, r_blk, 1)
    acc_ref[...] += jnp.sum(part, axis=1)            # (M, 1) f32 accumulator

    # ---- finalize on the last spatial chunk: weights, semantic MSE, coupled reduction.
    @pl.when(h == nh - 1)
    def _finalize():
        w_mask = w_ref[0]
        w_sem = w_ref[1]

        # add_loss weighting; mean over spatial dims via the accumulated sums
        mask_loss = acc_ref[...] * (w_mask / float(hw_total))          # (M, 1)

        # ---- loss_fn #2: semantic MSE, mean over embedding dim (f32, tiny)
        p = ps_ref[...].astype(jnp.float32)          # (M, D)
        g = gs_ref[...].astype(jnp.float32)          # (1, D)
        sem_loss = jnp.mean((p - g) ** 2, axis=-1, keepdims=True) * w_sem   # (M, 1)

        # ---- coupled reduction (per-sample; batch mean happens in the wrapper)
        total = mask_loss + sem_loss                                    # (M, 1)
        num_m = total.shape[0]
        min_val = jnp.min(total, axis=0, keepdims=True)                 # (1, 1)
        iota = jax.lax.broadcasted_iota(jnp.int32, (num_m, 1), 0)
        # first-occurrence argmin (matches torch.min tie-breaking)
        ind = jnp.min(jnp.where(total <= min_val, iota, num_m),
                      axis=0, keepdims=True)                            # (1, 1)
        onehot = (iota == ind).astype(jnp.float32)                      # (M, 1)
        sel_mask = jnp.sum(mask_loss * onehot, axis=0, keepdims=True)   # (1, 1)
        sel_sem = jnp.sum(sem_loss * onehot, axis=0, keepdims=True)     # (1, 1)

        # single packed (1, 3) store: [min_total, mask@argmin, sem@argmin]
        col = jax.lax.broadcasted_iota(jnp.int32, (1, 3), 1)
        out_ref[...] = (jnp.where(col == 0, min_val, 0.0)
                        + jnp.where(col == 1, sel_mask, 0.0)
                        + jnp.where(col == 2, sel_sem, 0.0))


# --------------------------------------------------------------------------- tiling
def _pick_lanes(hw, target_lanes):
    """Largest multiple of 128 <= target that divides hw; fall back to full extent."""
    if hw % 128 != 0:
        return hw
    l = min(max((target_lanes // 128) * 128, 128), hw)
    while l >= 128:
        if hw % l == 0:
            return l
        l -= 128
    return hw


def _pick_rows(r_total, max_rows):
    """Largest legal row block (<= max_rows) dividing r_total.
       Legal = multiple of 8 (dense f32 sublanes) or the full extent."""
    legal = [r_total]
    d = 8
    while d < r_total:
        if r_total % d == 0:
            legal.append(d)
        d += 8
    fit = [v for v in legal if v <= max_rows]
    return max(fit) if fit else min(legal)


def _elementwise_dtype(input_dtype):
    """bf16 elementwise only when inputs are bf16 AND the chip has bf16 VPU/EUP
       (v6e / v7x); v5e and unknown devices keep f32 math."""
    if input_dtype != jnp.bfloat16:
        return jnp.float32
    try:
        kind = jax.devices()[0].device_kind.lower()
    except Exception:
        return jnp.float32
    if ("v6" in kind) or ("v7" in kind) or ("trillium" in kind):
        return jnp.bfloat16
    return jnp.float32


# --------------------------------------------------------------------------- wrapper
def criterion_forward(pred_masks, gt_masks, pred_sem, gt_sem, loss_weights, *,
                      target_lanes=1024, max_pm_tile_elems=1 << 19,
                      elementwise_dtype=None):
    """Coupled-reduction Criterion forward.
       pred_masks: (B, M, H, W) logits; gt_masks: (B, H, W) in {0,1};
       pred_sem:   (B, M, D);            gt_sem:   (B, D);
       loss_weights: (2,) = [mask_weight, semantic_weight].
       Inputs are passed in their native dtype; casts happen per-tile in the kernel."""
    B, M, H, W = pred_masks.shape
    D = pred_sem.shape[-1]
    HW = H * W

    lanes = _pick_lanes(HW, target_lanes)
    r_total = HW // lanes
    max_rows = max(1, max_pm_tile_elems // (M * lanes))
    r_blk = _pick_rows(r_total, max_rows)
    n_h = r_total // r_blk

    if elementwise_dtype is None:
        elementwise_dtype = _elementwise_dtype(pred_masks.dtype)

    # zero-copy reshapes only (no wrapper-side casts of the large tensors)
    pm = pred_masks.reshape(B, M, r_total, lanes)
    gm = gt_masks.reshape(B, r_total, lanes)
    gs = gt_sem.reshape(B, 1, D)
    w = loss_weights.astype(jnp.float32)

    cost = pl.CostEstimate(
        flops=int(6 * B * M * HW + 4 * B * M * D + 32 * B * M),
        transcendentals=int(2 * B * M * HW),
        bytes_accessed=int(pred_masks.size * pred_masks.dtype.itemsize
                           + gt_masks.size * gt_masks.dtype.itemsize
                           + pred_sem.size * pred_sem.dtype.itemsize
                           + gt_sem.size * gt_sem.dtype.itemsize
                           + B * 3 * 4),
    )

    per_sample = pl.pallas_call(
        functools.partial(_criterion_kernel, HW, elementwise_dtype),
        out_shape=jax.ShapeDtypeStruct((B, 1, 3), jnp.float32),
        grid=(B, n_h),
        in_specs=[
            pl.BlockSpec(memory_space=pltpu.MemorySpace.SMEM),                 # weights
            pl.BlockSpec((None, M, r_blk, lanes), lambda b, h: (b, 0, h, 0)),  # pred masks
            pl.BlockSpec((None, r_blk, lanes), lambda b, h: (b, h, 0)),        # gt masks
            pl.BlockSpec((None, M, D), lambda b, h: (b, 0, 0)),                # pred sem
            pl.BlockSpec((None, 1, D), lambda b, h: (b, 0, 0)),                # gt sem
        ],
        out_specs=pl.BlockSpec((None, 1, 3), lambda b, h: (b, 0, 0)),
        scratch_shapes=[pltpu.VMEM((M, 1), jnp.float32)],
        compiler_params=pltpu.CompilerParams(
            dimension_semantics=("parallel", "arbitrary"),
            vmem_limit_bytes=32 * 1024 * 1024),
        cost_estimate=cost,
    )(w, pm, gm, pred_sem, gs)

    per_sample = per_sample.reshape(B, 3)
    return {
        "total_loss": jnp.mean(per_sample[:, 0]),
        "mask_loss": jnp.mean(per_sample[:, 1]),
        "semantic_loss": jnp.mean(per_sample[:, 2]),
    }


# --------------------------------------------------------------------------- reference
def _reference(pred_masks, gt_masks, pred_sem, gt_sem, loss_weights):
    """Pure-JAX reference mirroring the PyTorch coupled reduction (f32 math)."""
    B, M, H, W = pred_masks.shape
    x = pred_masks.reshape(B, M, H * W).astype(jnp.float32)
    t = gt_masks.reshape(B, 1, H * W).astype(jnp.float32)
    bce = jnp.maximum(x, 0.0) - x * t + jnp.log1p(jnp.exp(-jnp.abs(x)))
    mask_loss = jnp.mean(bce, axis=-1) * loss_weights[0]
    p = pred_sem.astype(jnp.float32)
    g = gt_sem.astype(jnp.float32)
    sem_loss = jnp.mean((p - g[:, None, :]) ** 2, axis=-1) * loss_weights[1]
    total = mask_loss + sem_loss
    ind = jnp.argmin(total, axis=1)
    val = jnp.min(total, axis=1)
    return (jnp.mean(val),
            jnp.mean(mask_loss[jnp.arange(B), ind]),
            jnp.mean(sem_loss[jnp.arange(B), ind]))


if __name__ == "__main__":
    key = jax.random.PRNGKey(0)
    B, M, H, W, D = 2, 3, 16, 16, 32   # batch, multimask candidates, spatial, embed dim

    k1, k2, k3, k4 = jax.random.split(key, 4)
    loss_weights = jnp.array([1.0, 0.5], dtype=jnp.float32)   # [mask w, semantic w]

    pm32 = jax.random.normal(k1, (B, M, H, W), dtype=jnp.float32)
    gm32 = (jax.random.uniform(k2, (B, H, W)) > 0.5).astype(jnp.float32)
    ps32 = jax.random.normal(k3, (B, M, D), dtype=jnp.float32)
    gs32 = jax.random.normal(k4, (B, D), dtype=jnp.float32)

    def check(out, ref, atol, rtol, tag):
        for name, r in zip(("total_loss", "mask_loss", "semantic_loss"), ref):
            assert jnp.allclose(out[name], r, atol=atol, rtol=rtol), (tag, name, out[name], r)

    # 1) f32 inputs, f32 elementwise math (single spatial chunk)
    out = criterion_forward(pm32, gm32, ps32, gs32, loss_weights)
    jax.block_until_ready(out)
    check(out, _reference(pm32, gm32, ps32, gs32, loss_weights), 1e-4, 1e-4, "f32")

    # 2) bf16 inputs with f32 elementwise math forced (native-dtype DMA + in-kernel upcast)
    pmb = pm32.astype(jnp.bfloat16)
    gmb = gm32.astype(jnp.bfloat16)
    psb = ps32.astype(jnp.bfloat16)
    gsb = gs32.astype(jnp.bfloat16)
    refb = _reference(pmb, gmb, psb, gsb, loss_weights)
    out = criterion_forward(pmb, gmb, psb, gsb, loss_weights,
                            elementwise_dtype=jnp.float32)
    jax.block_until_ready(out)
    check(out, refb, 1e-4, 1e-4, "bf16-in/f32-math")

    # 3) bf16 inputs, auto dtype (exercises the bf16 VPU/EUP path on v6e / v7x)
    out = criterion_forward(pmb, gmb, psb, gsb, loss_weights)
    jax.block_until_ready(out)
    assert jnp.allclose(out["total_loss"], refb[0], atol=2e-2, rtol=2e-2), (
        "bf16-auto", out["total_loss"], refb[0])

    # 4) larger masks with a tiny tile budget: exercises multi-chunk spatial accumulation
    H2 = W2 = 64
    j1, j2 = jax.random.split(k1)
    pm_big = jax.random.normal(j1, (B, M, H2, W2), dtype=jnp.float32)
    gm_big = (jax.random.uniform(j2, (B, H2, W2)) > 0.5).astype(jnp.float32)
    out = criterion_forward(pm_big, gm_big, ps32, gs32, loss_weights,
                            target_lanes=128, max_pm_tile_elems=3 * 128 * 8)
    jax.block_until_ready(out)
    check(out, _reference(pm_big, gm_big, ps32, gs32, loss_weights),
          1e-4, 1e-4, "multi-chunk")

    print("KERNEL_OK")
</pallas_src>

<mosaic_0001>
module attributes {stable_mosaic.version = 11 : i64} {
  func.func @_criterion_kernel(%arg0: i32, %arg1: i32, %arg2: memref<2xf32, #tpu.memory_space<smem>>, %arg3: memref<1x3x1x256xf32, #tpu.memory_space<vmem>>, %arg4: memref<1x1x256xf32, #tpu.memory_space<vmem>>, %arg5: memref<1x3x32xf32, #tpu.memory_space<vmem>>, %arg6: memref<1x1x32xf32, #tpu.memory_space<vmem>>, %arg7: memref<1x1x3xf32, #tpu.memory_space<vmem>>, %arg8: memref<3x1xf32, #tpu.memory_space<vmem>>) attributes {dimension_semantics = [#tpu.dimension_semantics<parallel>, #tpu.dimension_semantics<arbitrary>], iteration_bounds = array<i64: 2, 1>, scalar_prefetch = 0 : i64, scratch_operands = 1 : i64, tpu.core_type = #tpu.core_type<tc>, window_params = [{transform_indices = @transform_0, window_bounds = array<i64: 2>}, {transform_indices = @transform_1, window_bounds = array<i64: 1, 3, 1, 256>}, {transform_indices = @transform_2, window_bounds = array<i64: 1, 1, 256>}, {transform_indices = @transform_3, window_bounds = array<i64: 1, 3, 32>}, {transform_indices = @transform_4, window_bounds = array<i64: 1, 1, 32>}, {transform_indices = @transform_5, window_bounds = array<i64: 1, 1, 3>}]} {
    %c0_i32 = arith.constant 0 : i32
    %0 = arith.cmpi eq, %arg1, %c0_i32 : i32
    %1 = arith.extui %0 : i1 to i32
    %c0_i32_0 = arith.constant 0 : i32
    %2 = arith.cmpi ne, %1, %c0_i32_0 : i32
    scf.if %2 {
      %cst_16 = arith.constant 0.000000e+00 : f32
      %28 = vector.broadcast %cst_16 : f32 to vector<3x1xf32>
      %c0_17 = arith.constant 0 : index
      %c0_18 = arith.constant 0 : index
      %29 = vector.load %arg8[%c0_17, %c0_18] : memref<3x1xf32, #tpu.memory_space<vmem>>, vector<3x1xf32>
      tpu.vector_store %arg8[%c0_17, %c0_18], %28 {strides = array<i32>} : memref<3x1xf32, #tpu.memory_space<vmem>>, vector<3x1xf32>,
    } else {
    }
    %c0 = arith.constant 0 : index
    %c0_1 = arith.constant 0 : index
    %c0_2 = arith.constant 0 : index
    %c0_3 = arith.constant 0 : index
    %3 = vector.load %arg3[%c0, %c0_1, %c0_2, %c0_3] : memref<1x3x1x256xf32, #tpu.memory_space<vmem>>, vector<1x3x1x256xf32>
    %4 = vector.shape_cast %3 : vector<1x3x1x256xf32> to vector<3x1x256xf32>
    %c0_4 = arith.constant 0 : index
    %c0_5 = arith.constant 0 : index
    %c0_6 = arith.constant 0 : index
    %5 = vector.load %arg4[%c0_4, %c0_5, %c0_6] : memref<1x1x256xf32, #tpu.memory_space<vmem>>, vector<1x1x256xf32>
    %6 = vector.shape_cast %5 : vector<1x1x256xf32> to vector<1x256xf32>
    %cst = arith.constant 0.000000e+00 : f32
    %7 = vector.broadcast %cst : f32 to vector<3x1x256xf32>
    %8 = arith.maximumf %4, %7 : vector<3x1x256xf32>
    %9 = vector.shape_cast %6 : vector<1x256xf32> to vector<1x1x256xf32>
    %10 = vector.broadcast %9 : vector<1x1x256xf32> to vector<3x1x256xf32>
    %11 = arith.mulf %4, %10 : vector<3x1x256xf32>
    %12 = arith.subf %8, %11 : vector<3x1x256xf32>
    %13 = math.absf %4 : vector<3x1x256xf32>
    %cst_7 = arith.constant 0.000000e+00 : f32
    %14 = vector.broadcast %cst_7 : f32 to vector<3x1x256xf32>
    %15 = arith.subf %14, %13 : vector<3x1x256xf32>
    %16 = math.exp %15 : vector<3x1x256xf32>
    %17 = math.log1p %16 : vector<3x1x256xf32>
    %18 = arith.addf %12, %17 : vector<3x1x256xf32>
    %cst_8 = arith.constant dense<0.000000e+00> : vector<3x1xf32>
    %19 = vector.multi_reduction <add>, %18, %cst_8 [2] : vector<3x1x256xf32> to vector<3x1xf32>
    %20 = vector.shape_cast %19 : vector<3x1xf32> to vector<3x1x1xf32>
    %c0_9 = arith.constant 0 : index
    %c0_10 = arith.constant 0 : index
    %21 = vector.load %arg8[%c0_9, %c0_10] : memref<3x1xf32, #tpu.memory_space<vmem>>, vector<3x1xf32>
    %cst_11 = arith.constant dense<0.000000e+00> : vector<3x1xf32>
    %22 = vector.multi_reduction <add>, %20, %cst_11 [1] : vector<3x1x1xf32> to vector<3x1xf32>
    %23 = arith.addf %21, %22 : vector<3x1xf32>
    %c0_12 = arith.constant 0 : index
    %c0_13 = arith.constant 0 : index
    %24 = vector.load %arg8[%c0_12, %c0_13] : memref<3x1xf32, #tpu.memory_space<vmem>>, vector<3x1xf32>
    tpu.vector_store %arg8[%c0_12, %c0_13], %23 {strides = array<i32>} : memref<3x1xf32, #tpu.memory_space<vmem>>, vector<3x1xf32>,
    %c0_i32_14 = arith.constant 0 : i32
    %25 = arith.cmpi eq, %arg1, %c0_i32_14 : i32
    %26 = arith.extui %25 : i1 to i32
    %c0_i32_15 = arith.constant 0 : i32
    %27 = arith.cmpi ne, %26, %c0_i32_15 : i32
    scf.if %27 {
      %c0_16 = arith.constant 0 : index
      %28 = memref.load %arg2[%c0_16] : memref<2xf32, #tpu.memory_space<smem>>
      %c1 = arith.constant 1 : index
      %29 = memref.load %arg2[%c1] : memref<2xf32, #tpu.memory_space<smem>>
      %c0_17 = arith.constant 0 : index
      %c0_18 = arith.constant 0 : index
      %30 = vector.load %arg8[%c0_17, %c0_18] : memref<3x1xf32, #tpu.memory_space<vmem>>, vector<3x1xf32>
      %cst_19 = arith.constant 2.560000e+02 : f32
      %31 = arith.divf %28, %cst_19 : f32
      %32 = vector.broadcast %31 : f32 to vector<3x1xf32>
      %33 = arith.mulf %30, %32 : vector<3x1xf32>
      %c0_20 = arith.constant 0 : index
      %c0_21 = arith.constant 0 : index
      %c0_22 = arith.constant 0 : index
      %34 = vector.load %arg5[%c0_20, %c0_21, %c0_22] : memref<1x3x32xf32, #tpu.memory_space<vmem>>, vector<1x3x32xf32>
      %35 = vector.shape_cast %34 : vector<1x3x32xf32> to vector<3x32xf32>
      %c0_23 = arith.constant 0 : index
      %c0_24 = arith.constant 0 : index
      %c0_25 = arith.constant 0 : index
      %36 = vector.load %arg6[%c0_23, %c0_24, %c0_25] : memref<1x1x32xf32, #tpu.memory_space<vmem>>, vector<1x1x32xf32>
      %37 = vector.shape_cast %36 : vector<1x1x32xf32> to vector<1x32xf32>
      %38 = vector.broadcast %37 : vector<1x32xf32> to vector<3x32xf32>
      %39 = arith.subf %35, %38 : vector<3x32xf32>
      %40 = arith.mulf %39, %39 : vector<3x32xf32>
      %cst_26 = arith.constant dense<0.000000e+00> : vector<3xf32>
      %41 = vector.multi_reduction <add>, %40, %cst_26 [1] : vector<3x32xf32> to vector<3xf32>
      %42 = vector.shape_cast %41 : vector<3xf32> to vector<3x1xf32>
      %cst_27 = arith.constant 3.200000e+01 : f32
      %43 = vector.broadcast %cst_27 : f32 to vector<3x1xf32>
      %44 = arith.divf %42, %43 : vector<3x1xf32>
      %45 = vector.broadcast %29 : f32 to vector<3x1xf32>
      %46 = arith.mulf %44, %45 : vector<3x1xf32>
      %47 = arith.addf %33, %46 : vector<3x1xf32>
      %cst_28 = arith.constant dense<0x7F800000> : vector<1xf32>
      %48 = vector.multi_reduction <minimumf>, %47, %cst_28 [0] : vector<3x1xf32> to vector<1xf32>
      %49 = vector.shape_cast %48 : vector<1xf32> to vector<1x1xf32>
      %50 = tpu.iota {dimensions = array<i32: 0>} : vector<3x1xi32>
      %51 = vector.broadcast %49 : vector<1x1xf32> to vector<3x1xf32>
      %52 = arith.cmpf ole, %47, %51 : vector<3x1xf32>
      %c3_i32 = arith.constant 3 : i32
      %53 = vector.broadcast %c3_i32 : i32 to vector<3x1xi32>
      %54 = arith.select %52, %50, %53 : vector<3x1xi1>, vector<3x1xi32>
      %cst_29 = arith.constant dense<2147483647> : vector<1xi32>
      %55 = vector.multi_reduction <minsi>, %54, %cst_29 [0] : vector<3x1xi32> to vector<1xi32>
      %56 = vector.shape_cast %55 : vector<1xi32> to vector<1x1xi32>
      %57 = vector.broadcast %56 : vector<1x1xi32> to vector<3x1xi32>
      %58 = arith.cmpi eq, %50, %57 : vector<3x1xi32>
      %59 = arith.extui %58 : vector<3x1xi1> to vector<3x1xi32>
      %60 = arith.sitofp %59 : vector<3x1xi32> to vector<3x1xf32>
      %61 = arith.mulf %33, %60 : vector<3x1xf32>
      %cst_30 = arith.constant dense<0.000000e+00> : vector<1xf32>
      %62 = vector.multi_reduction <add>, %61, %cst_30 [0] : vector<3x1xf32> to vector<1xf32>
      %63 = vector.shape_cast %62 : vector<1xf32> to vector<1x1xf32>
      %64 = arith.mulf %46, %60 : vector<3x1xf32>
      %cst_31 = arith.constant dense<0.000000e+00> : vector<1xf32>
      %65 = vector.multi_reduction <add>, %64, %cst_31 [0] : vector<3x1xf32> to vector<1xf32>
      %66 = vector.shape_cast %65 : vector<1xf32> to vector<1x1xf32>
      %67 = tpu.iota {dimensions = array<i32: 1>} : vector<1x3xi32>
      %c0_i32_32 = arith.constant 0 : i32
      %68 = vector.broadcast %c0_i32_32 : i32 to vector<1x3xi32>
      %69 = arith.cmpi eq, %67, %68 : vector<1x3xi32>
      %cst_33 = arith.constant 0.000000e+00 : f32
      %70 = vector.shape_cast %49 : vector<1x1xf32> to vector<1x1xf32>
      %71 = vector.broadcast %70 : vector<1x1xf32> to vector<1x3xf32>
      %72 = vector.broadcast %cst_33 : f32 to vector<1x3xf32>
      %73 = arith.select %69, %71, %72 : vector<1x3xi1>, vector<1x3xf32>
      %c1_i32 = arith.constant 1 : i32
      %74 = vector.broadcast %c1_i32 : i32 to vector<1x3xi32>
      %75 = arith.cmpi eq, %67, %74 : vector<1x3xi32>
      %cst_34 = arith.constant 0.000000e+00 : f32
      %76 = vector.shape_cast %63 : vector<1x1xf32> to vector<1x1xf32>
      %77 = vector.broadcast %76 : vector<1x1xf32> to vector<1x3xf32>
      %78 = vector.broadcast %cst_34 : f32 to vector<1x3xf32>
      %79 = arith.select %75, %77, %78 : vector<1x3xi1>, vector<1x3xf32>
      %80 = arith.addf %73, %79 : vector<1x3xf32>
      %c2_i32 = arith.constant 2 : i32
      %81 = vector.broadcast %c2_i32 : i32 to vector<1x3xi32>
      %82 = arith.cmpi eq, %67, %81 : vector<1x3xi32>
      %cst_35 = arith.constant 0.000000e+00 : f32
      %83 = vector.shape_cast %66 : vector<1x1xf32> to vector<1x1xf32>
      %84 = vector.broadcast %83 : vector<1x1xf32> to vector<1x3xf32>
      %85 = vector.broadcast %cst_35 : f32 to vector<1x3xf32>
      %86 = arith.select %82, %84, %85 : vector<1x3xi1>, vector<1x3xf32>
      %87 = arith.addf %80, %86 : vector<1x3xf32>
      %c0_36 = arith.constant 0 : index
      %c0_37 = arith.constant 0 : index
      %c0_38 = arith.constant 0 : index
      %88 = vector.load %arg7[%c0_36, %c0_37, %c0_38] : memref<1x1x3xf32, #tpu.memory_space<vmem>>, vector<1x1x3xf32>
      %89 = vector.shape_cast %88 : vector<1x1x3xf32> to vector<1x3xf32>
      %90 = vector.shape_cast %87 : vector<1x3xf32> to vector<1x1x3xf32>
      tpu.vector_store %arg7[%c0_36, %c0_37, %c0_38], %90 {strides = array<i32>} : memref<1x1x3xf32, #tpu.memory_space<vmem>>, vector<1x1x3xf32>,
    } else {
    }
    return
  }
  func.func @transform_0(%arg0: i32, %arg1: i32) -> i32 {
    %c0_i32 = arith.constant 0 : i32
    %c0_i32_0 = arith.constant 0 : i32
    return %c0_i32 : i32
  }
  func.func @transform_1(%arg0: i32, %arg1: i32) -> (i32, i32, i32, i32) {
    %c0_i32 = arith.constant 0 : i32
    %c0_i32_0 = arith.constant 0 : i32
    %c0_i32_1 = arith.constant 0 : i32
    return %arg0, %c0_i32, %arg1, %c0_i32_0 : i32, i32, i32, i32
  }
  func.func @transform_2(%arg0: i32, %arg1: i32) -> (i32, i32, i32) {
    %c0_i32 = arith.constant 0 : i32
    %c0_i32_0 = arith.constant 0 : i32
    return %arg0, %arg1, %c0_i32 : i32, i32, i32
  }
  func.func @transform_3(%arg0: i32, %arg1: i32) -> (i32, i32, i32) {
    %c0_i32 = arith.constant 0 : i32
    %c0_i32_0 = arith.constant 0 : i32
    %c0_i32_1 = arith.constant 0 : i32
    return %arg0, %c0_i32, %c0_i32_0 : i32, i32, i32
  }
  func.func @transform_4(%arg0: i32, %arg1: i32) -> (i32, i32, i32) {
    %c0_i32 = arith.constant 0 : i32
    %c0_i32_0 = arith.constant 0 : i32
    %c0_i32_1 = arith.constant 0 : i32
    return %arg0, %c0_i32, %c0_i32_0 : i32, i32, i32
  }
  func.func @transform_5(%arg0: i32, %arg1: i32) -> (i32, i32, i32) {
    %c0_i32 = arith.constant 0 : i32
    %c0_i32_0 = arith.constant 0 : i32
    %c0_i32_1 = arith.constant 0 : i32
    return %arg0, %c0_i32, %c0_i32_0 : i32, i32, i32
  }
}

</mosaic_0001>

<llo_original>
// kernel: tpu_custom_call.1
$region0: #{tpu_custom_call.1}
  #allocation0 [shape = 'u32[]', space=smem, size = 0x4, offset = 0x4, fixed_abs, tag = 'smem constant byte address 0x4 - core index']
  #allocation1 [shape = 'u32[144,128]{1,0:T(1,128)}', space=vmem, size = 0x12000, scoped, tag = 'internal scratch']
  #allocation2 [shape = 'f32[3,1]{1,0:T(4,128)}', space=vmem, size = 0x800, scoped, tag = 'scratch operand']
  %s0 = inlined_call_operand.vmem [shape: f32[2], index: 0, kind: input, shape index: {}]
  %s1 = inlined_call_operand.vmem [shape: f32[2,3,1,256], index: 1, kind: input, shape index: {}]
  %s2 = inlined_call_operand.vmem [shape: f32[2,1,256], index: 2, kind: input, shape index: {}]
  %s3 = inlined_call_operand.vmem [shape: f32[2,3,32], index: 3, kind: input, shape index: {}]
  %s4 = inlined_call_operand.vmem [shape: f32[2,1,32], index: 4, kind: input, shape index: {}]
  %s5 = inlined_call_operand.hbm [shape: f32[2,1,3], index: 5, kind: output, shape index: {}]
  %s6 = sld [smem:[#allocation0]]
  $region65: #{tpu_custom_call.1} parent=0
    _
  %s8 = ssub.s32 1, %s6
  %s9 = scalar_select 0, %s8, %s6
  $region1: #{tpu_custom_call.1} parent=0
    #allocation3 [shape = 'u8[512]{0}', space=smem, size = 0x200, scoped, tag = 'input window, operand 0, single buffered']
    #allocation4 [shape = 's32[2]{0}', space=sflag, size = 0x8, scoped, tag = 'scoped memory for tpu_custom_call.1']
    #allocation5 [shape = 's32[2]{0}', space=sflag, size = 0x8, scoped, tag = 'scoped memory for tpu_custom_call.1']
    #allocation6 [shape = 'u8[1024]{0}', space=vmem, size = 0x400, scoped, tag = 'output window, operand 0']
    %10 = vsyncpa [#allocation5], 0
    %11 = vsyncpa [#allocation4], 0
    %s12 = scalar_lea.sflag [#allocation4], 1
    %13 = vsyncpa %s12, 0
    loop: start=0, step=1, limit=4
    $region2: #{tpu_custom_call.1} parent=1 // loop_pre_header
      _
    $region3: #{tpu_custom_call.1} parent=1 // loop_header
      %s15 = sphi 0, %s19
      %p16 = scmp.ge.s32.totalorder %s15, 4
      %s22 = sphi 0, %s34
      %s23 = sphi 0, %s30
      %s24 = sphi 0, %s22
      %s25 = sphi 0, %s23
      %s26 = sphi 0, %s24
      %s27 = sphi 0, %s25
      %s35 = sphi 0, %s35
      %s37 = sphi 0, %s35
      %s38 = sphi 0, %s37
      %s52 = sphi 0, %s38
      %s60 = sphi 0, %s62
      %s63 = sphi 0, %s60
      %s64 = sphi 0, %s63
      %s80 = sphi 0, %s64
      %s88 = sphi 0, %s90
      %s91 = sphi 0, %s88
      %s92 = sphi 0, %s91
      %s108 = sphi 0, %s92
      %s114 = sphi 0, %s116
      %s117 = sphi 0, %s114
      %s118 = sphi 0, %s117
      %s134 = sphi 0, %s118
      %s140 = sphi 0, %s142
      %s143 = sphi 0, %s140
      %s144 = sphi 0, %s143
      %s160 = sphi 0, %s144
      %s166 = sphi 0, %s168
      %s169 = sphi 0, %s166
      %s170 = sphi 0, %s169
      %s186 = sphi 0, %s170
    $region4: #{tpu_custom_call.1} parent=1 // loop_header_branch
      %18 = sbr.rel (%p16) target = $region8
    $region5: #{tpu_custom_call.1} parent=1 // loop_body
      %s20 = ssub.s32 %s15, 1
      %s21 = ssub.s32 %s15, 2
      %s28 = sadd.s32 1, %s23
      %p29 = scmp.ge.s32.totalorder %s28, 1
      %s30 = scalar_select %p29, 0, %s28
      %s31 = sadd.s32 1, %s22
      %s32 = scalar_select %p29, %s31, %s22
      %p33 = scmp.ge.s32.totalorder %s32, 2
      %s34 = scalar_select %p33, 0, %s32
      %s36 = sadd.s32 %s35, 1
      %p39 = scmp.eq.s32.totalorder %s15, 1
      %p40 = scmp.ne.s32.totalorder %s35, %s37
      %p41 = scmp.eq.s32.totalorder %s15, 0
      %p42 = por %p40, %p41
      %p43 = scmp.ne.s32.totalorder %s35, %s37
      %p44 = scmp.eq.s32.totalorder %s20, 1
      %p45 = por %p43, %p44
      %p46 = scmp.ne.s32.totalorder %s37, %s38
      %p47 = scmp.eq.s32.totalorder %s20, 0
      %p48 = por %p46, %p47
      %p49 = scmp.ne.s32.totalorder %s37, %s38
      %p50 = scmp.eq.s32.totalorder %s21, 1
      %p51 = por %p49, %p50
      %p53 = scmp.ne.s32.totalorder %s38, %s52
      %p54 = scmp.eq.s32.totalorder %s21, 0
      %p55 = por %p53, %p54
      %s56 = ssub.s32 %s22, %s34
      %s57 = ssub.s32 %s23, %s30
      %s58 = sor.u32 %s56, %s57
      %p59 = scmp.eq.s32.totalorder %s58, 0
      %s61 = sadd.s32 %s60, 1
      %s62 = scalar_select %p59, %s60, %s61
      %p65 = pneg %p59
      %p66 = scmp.eq.s32.totalorder %s15, 1
      %p67 = por %p65, %p66
      %p68 = scmp.ne.s32.totalorder %s60, %s63
      %p69 = scmp.eq.s32.totalorder %s15, 0
      %p70 = por %p68, %p69
      %p71 = scmp.ne.s32.totalorder %s60, %s63
      %p72 = scmp.eq.s32.totalorder %s20, 1
      %p73 = por %p71, %p72
      %p74 = scmp.ne.s32.totalorder %s63, %s64
      %p75 = scmp.eq.s32.totalorder %s20, 0
      %p76 = por %p74, %p75
      %p77 = scmp.ne.s32.totalorder %s63, %s64
      %p78 = scmp.eq.s32.totalorder %s21, 1
      %p79 = por %p77, %p78
      %p81 = scmp.ne.s32.totalorder %s64, %s80
      %p82 = scmp.eq.s32.totalorder %s21, 0
      %p83 = por %p81, %p82
      %s84 = ssub.s32 %s22, %s34
      %s85 = ssub.s32 %s23, %s30
      %s86 = sor.u32 %s84, %s85
      %p87 = scmp.eq.s32.totalorder %s86, 0
      %s89 = sadd.s32 %s88, 1
      %s90 = scalar_select %p87, %s88, %s89
      %p93 = pneg %p87
      %p94 = scmp.eq.s32.totalorder %s15, 1
      %p95 = por %p93, %p94
      %p96 = scmp.ne.s32.totalorder %s88, %s91
      %p97 = scmp.eq.s32.totalorder %s15, 0
      %p98 = por %p96, %p97
      %p99 = scmp.ne.s32.totalorder %s88, %s91
      %p100 = scmp.eq.s32.totalorder %s20, 1
      %p101 = por %p99, %p100
      %p102 = scmp.ne.s32.totalorder %s91, %s92
      %p103 = scmp.eq.s32.totalorder %s20, 0
      %p104 = por %p102, %p103
      %p105 = scmp.ne.s32.totalorder %s91, %s92
      %p106 = scmp.eq.s32.totalorder %s21, 1
      %p107 = por %p105, %p106
      %p109 = scmp.ne.s32.totalorder %s92, %s108
      %p110 = scmp.eq.s32.totalorder %s21, 0
      %p111 = por %p109, %p110
      %s112 = ssub.s32 %s22, %s34
      %p113 = scmp.eq.s32.totalorder %s112, 0
      %s115 = sadd.s32 %s114, 1
      %s116 = scalar_select %p113, %s114, %s115
      %p119 = pneg %p113
      %p120 = scmp.eq.s32.totalorder %s15, 1
      %p121 = por %p119, %p120
      %p122 = scmp.ne.s32.totalorder %s114, %s117
      %p123 = scmp.eq.s32.totalorder %s15, 0
      %p124 = por %p122, %p123
      %p125 = scmp.ne.s32.totalorder %s114, %s117
      %p126 = scmp.eq.s32.totalorder %s20, 1
      %p127 = por %p125, %p126
      %p128 = scmp.ne.s32.totalorder %s117, %s118
      %p129 = scmp.eq.s32.totalorder %s20, 0
      %p130 = por %p128, %p129
      %p131 = scmp.ne.s32.totalorder %s117, %s118
      %p132 = scmp.eq.s32.totalorder %s21, 1
      %p133 = por %p131, %p132
      %p135 = scmp.ne.s32.totalorder %s118, %s134
      %p136 = scmp.eq.s32.totalorder %s21, 0
      %p137 = por %p135, %p136
      %s138 = ssub.s32 %s22, %s34
      %p139 = scmp.eq.s32.totalorder %s138, 0
      %s141 = sadd.s32 %s140, 1
      %s142 = scalar_select %p139, %s140, %s141
      %p145 = pneg %p139
      %p146 = scmp.eq.s32.totalorder %s15, 1
      %p147 = por %p145, %p146
      %p148 = scmp.ne.s32.totalorder %s140, %s143
      %p149 = scmp.eq.s32.totalorder %s15, 0
      %p150 = por %p148, %p149
      %p151 = scmp.ne.s32.totalorder %s140, %s143
      %p152 = scmp.eq.s32.totalorder %s20, 1
      %p153 = por %p151, %p152
      %p154 = scmp.ne.s32.totalorder %s143, %s144
      %p155 = scmp.eq.s32.totalorder %s20, 0
      %p156 = por %p154, %p155
      %p157 = scmp.ne.s32.totalorder %s143, %s144
      %p158 = scmp.eq.s32.totalorder %s21, 1
      %p159 = por %p157, %p158
      %p161 = scmp.ne.s32.totalorder %s144, %s160
      %p162 = scmp.eq.s32.totalorder %s21, 0
      %p163 = por %p161, %p162
      %s164 = ssub.s32 %s22, %s34
      %p165 = scmp.eq.s32.totalorder %s164, 0
      %s167 = sadd.s32 %s166, 1
      %s168 = scalar_select %p165, %s166, %s167
      %p171 = pneg %p165
      %p172 = scmp.eq.s32.totalorder %s15, 1
      %p173 = por %p171, %p172
      %p174 = scmp.ne.s32.totalorder %s166, %s169
      %p175 = scmp.eq.s32.totalorder %s15, 0
      %p176 = por %p174, %p175
      %p177 = scmp.ne.s32.totalorder %s166, %s169
      %p178 = scmp.eq.s32.totalorder %s20, 1
      %p179 = por %p177, %p178
      %p180 = scmp.ne.s32.totalorder %s169, %s170
      %p181 = scmp.eq.s32.totalorder %s20, 0
      %p182 = por %p180, %p181
      %p183 = scmp.ne.s32.totalorder %s169, %s170
      %p184 = scmp.eq.s32.totalorder %s21, 1
      %p185 = por %p183, %p184
      %p187 = scmp.ne.s32.totalorder %s170, %s186
      %p188 = scmp.eq.s32.totalorder %s21, 0
      %p189 = por %p187, %p188
      %p190 = scmp.le.s32.totalorder 1, %s15
      %p191 = scmp.lt.s32.totalorder %s15, 3
      %p192 = pnand %p190, %p191
      %p193 = pneg %p192
      // Predicated region
      $region9: #{tpu_custom_call.1} parent=5 // pred_check
        _
      $region10: #{tpu_custom_call.1} parent=5 // pred_check_branch
        %195 = sbr.rel (%p192) target = $region12
      $region11: #{tpu_custom_call.1} parent=5 // pred_region
        %s196 = ssub.s32 %s15, 1
        // Predicated region
        $region13: #{tpu_custom_call.1} parent=11 // pred_check
          %p197 = pneg %p48
        $region14: #{tpu_custom_call.1} parent=11 // pred_check_branch
          %199 = sbr.rel (%p197) target = $region16
        $region15: #{tpu_custom_call.1} parent=11 // pred_region
          %s201 = ssub.s32 16, 16
          %202 = vsyncadd [#allocation5], %s201
          %s204 = sshll.u32 %s0, 4
          %s205 = int_to_ptr.vmem [resolvable:$true] %s204
          %207 = dma.vmem_to_smem %s205, 16, [#allocation3], [#allocation5]
        $region16: #{tpu_custom_call.1} parent=11 // pred_fallthru
          _
      $region12: #{tpu_custom_call.1} parent=5 // pred_fallthru
        _
      %p208 = scmp.lt.s32.totalorder %s15, 2
      // Predicated region
      $region17: #{tpu_custom_call.1} parent=5 // pred_check
        %p209 = pneg %p208
      $region18: #{tpu_custom_call.1} parent=5 // pred_check_branch
        %211 = sbr.rel (%p209) target = $region20
      $region19: #{tpu_custom_call.1} parent=5 // pred_region
        // Predicated region
        $region21: #{tpu_custom_call.1} parent=19 // pred_check
          %p212 = pneg %p70
        $region22: #{tpu_custom_call.1} parent=19 // pred_check_branch
          %214 = sbr.rel (%p212) target = $region24
        $region23: #{tpu_custom_call.1} parent=19 // pred_region
          %p215 = scmp.lt.s32.totalorder %s22, 1
          %s216 = scalar_select %p215, %s22, 1
          %p217 = scmp.lt.s32.totalorder %s23, 0
          %s218 = scalar_select %p217, %s23, 0
          %s219 = smul.addr %s218, 2
          %s220 = smul.addr %s216, 6
          %s221 = sadd.s32 %s219, %s220
          %s222 = scalar_lea.vmem %s1, %s221
        $region24: #{tpu_custom_call.1} parent=19 // pred_fallthru
          _
        // Predicated region
        $region25: #{tpu_custom_call.1} parent=19 // pred_check
          %p223 = pneg %p98
        $region26: #{tpu_custom_call.1} parent=19 // pred_check_branch
          %225 = sbr.rel (%p223) target = $region28
        $region27: #{tpu_custom_call.1} parent=19 // pred_region
          %p226 = scmp.lt.s32.totalorder %s22, 1
          %s227 = scalar_select %p226, %s22, 1
          %p228 = scmp.lt.s32.totalorder %s23, 0
          %s229 = scalar_select %p228, %s23, 0
          %s230 = smul.addr %s229, 2
          %s231 = smul.addr %s227, 2
          %s232 = sadd.s32 %s230, %s231
          %s233 = scalar_lea.vmem %s2, %s232
        $region28: #{tpu_custom_call.1} parent=19 // pred_fallthru
          _
        // Predicated region
        $region29: #{tpu_custom_call.1} parent=19 // pred_check
          %p234 = pneg %p124
        $region30: #{tpu_custom_call.1} parent=19 // pred_check_branch
          %236 = sbr.rel (%p234) target = $region32
        $region31: #{tpu_custom_call.1} parent=19 // pred_region
          %p237 = scmp.lt.s32.totalorder %s22, 1
          %s238 = scalar_select %p237, %s22, 1
          %s239 = smul.addr %s238, 4
          %s240 = scalar_lea.vmem %s3, %s239
        $region32: #{tpu_custom_call.1} parent=19 // pred_fallthru
          _
        // Predicated region
        $region33: #{tpu_custom_call.1} parent=19 // pred_check
          %p241 = pneg %p150
        $region34: #{tpu_custom_call.1} parent=19 // pred_check_branch
          %243 = sbr.rel (%p241) target = $region36
        $region35: #{tpu_custom_call.1} parent=19 // pred_region
          %p244 = scmp.lt.s32.totalorder %s22, 1
          %s245 = scalar_select %p244, %s22, 1
          %s246 = scalar_lea.vmem %s4, %s245
        $region36: #{tpu_custom_call.1} parent=19 // pred_fallthru
          _
      $region20: #{tpu_custom_call.1} parent=5 // pred_fallthru
        _
      %p247 = scmp.le.s32.totalorder 1, %s15
      %p248 = scmp.lt.s32.totalorder %s15, 3
      %p249 = pnand %p247, %p248
      %p250 = pneg %p249
      // Predicated region
      $region37: #{tpu_custom_call.1} parent=5 // pred_check
        _
      $region38: #{tpu_custom_call.1} parent=5 // pred_check_branch
        %252 = sbr.rel (%p249) target = $region40
      $region39: #{tpu_custom_call.1} parent=5 // pred_region
        %s253 = ssub.s32 %s15, 1
        // Predicated region
        $region41: #{tpu_custom_call.1} parent=39 // pred_check
          %p254 = pneg %p48
        $region42: #{tpu_custom_call.1} parent=39 // pred_check_branch
          %256 = sbr.rel (%p254) target = $region44
        $region43: #{tpu_custom_call.1} parent=39 // pred_region
          %257 = dma.done [#allocation5], 16
        $region44: #{tpu_custom_call.1} parent=39 // pred_fallthru
          _
        %258 = sfence
        %p259 = pneg %p48
        %p260 = pneg %p45
        %p261 = scmp.lt.s32.totalorder %s24, 1
        %s262 = scalar_select %p261, %s24, 1
        %p263 = scmp.lt.s32.totalorder %s25, 0
        %s264 = scalar_select %p263, %s25, 0
        %s265 = smul.addr %s264, 2
        %s266 = smul.addr %s262, 6
        %s267 = sadd.s32 %s265, %s266
        %s268 = scalar_lea.vmem %s1, %s267
        %p269 = pneg %p76
        %p270 = pneg %p73
        %p271 = scmp.lt.s32.totalorder %s24, 1
        %s272 = scalar_select %p271, %s24, 1
        %p273 = scmp.lt.s32.totalorder %s25, 0
        %s274 = scalar_select %p273, %s25, 0
        %s275 = smul.addr %s274, 2
        %s276 = smul.addr %s272, 2
        %s277 = sadd.s32 %s275, %s276
        %s278 = scalar_lea.vmem %s2, %s277
        %p279 = pneg %p104
        %p280 = pneg %p101
        %p281 = scmp.lt.s32.totalorder %s24, 1
        %s282 = scalar_select %p281, %s24, 1
        %s283 = smul.addr %s282, 4
        %s284 = scalar_lea.vmem %s3, %s283
        %p285 = pneg %p130
        %p286 = pneg %p127
        %p287 = scmp.lt.s32.totalorder %s24, 1
        %s288 = scalar_select %p287, %s24, 1
        %s289 = scalar_lea.vmem %s4, %s288
        %p290 = pneg %p156
        %p291 = pneg %p153
        %p292 = pneg %p182
        %p293 = pneg %p179
        %s294 = sand.u32 %s169, 1
        %s295 = scalar_lea.sflag [#allocation4], %s294
        %s296 = sand.u32 %s169, 1
        %s297 = scalar_lea.vmem [#allocation6], %s296
        %p298 = scmp.lt.s32.totalorder %s24, 1
        %s299 = scalar_select %p298, %s24, 1
        %p300 = scmp.lt.s32.totalorder %s25, 0
        %s301 = scalar_select %p300, %s25, 0
        %s302 = smul.addr %s301, 2
        %s303 = smul.addr %s299, 6
        %s304 = sadd.s32 %s302, %s303
        %s305 = scalar_lea.vmem %s1, %s304
        %p306 = scmp.lt.s32.totalorder %s24, 1
        %s307 = scalar_select %p306, %s24, 1
        %p308 = scmp.lt.s32.totalorder %s25, 0
        %s309 = scalar_select %p308, %s25, 0
        %s310 = smul.addr %s309, 2
        %s311 = smul.addr %s307, 2
        %s312 = sadd.s32 %s310, %s311
        %s313 = scalar_lea.vmem %s2, %s312
        %p314 = scmp.lt.s32.totalorder %s24, 1
        %s315 = scalar_select %p314, %s24, 1
        %s316 = smul.addr %s315, 4
        %s317 = scalar_lea.vmem %s3, %s316
        %p318 = scmp.lt.s32.totalorder %s24, 1
        %s319 = scalar_select %p318, %s24, 1
        %s320 = scalar_lea.vmem %s4, %s319
        %p321 = scmp.eq.s32.totalorder %s25, 0
        // Predicated region
        $region45: #{tpu_custom_call.1} parent=39 // pred_check
          %p322 = pneg %p321
        $region46: #{tpu_custom_call.1} parent=39 // pred_check_branch
          %324 = sbr.rel (%p322) target = $region48
        $region47: #{tpu_custom_call.1} parent=39 // pred_region
          %vm325 = vcmask 2048
          %326 = vst.msk [vmem:[#allocation2] sm:$0x7] %vm325, 0.0
        $region48: #{tpu_custom_call.1} parent=39 // pred_fallthru
          _
        %v327 = vld [vmem:[%s305] sm:$0x3]
        %v328 = vld [vmem:[%s305 + $0x2] sm:$0x3]
        %v329 = vld [vmem:[%s305 + $0x4] sm:$0x3]
        %v330 = vld [vmem:[%s313] sm:$0x3]
        %v331 = vmax.f32 %v327, 0.0
        %v332 = vmax.f32 %v328, 0.0
        %v333 = vmax.f32 %v329, 0.0
        %v334 = vmul.f32 %v327, %v330
        %v335 = vmul.f32 %v328, %v330
        %v336 = vmul.f32 %v329, %v330
        %v337 = vsub.f32 %v331, %v334
        %v338 = vsub.f32 %v332, %v335
        %v339 = vsub.f32 %v333, %v336
        %v340 = vand.u32 2147483647, %v327
        %v341 = vand.u32 2147483647, %v328
        %v342 = vand.u32 2147483647, %v329
        %v343 = vsub.f32 0.0, %v340
        %v344 = vsub.f32 0.0, %v341
        %v345 = vsub.f32 0.0, %v342
        %v346 = vmul.f32 %v343, 1.442695
        %v347 = vpow.pop %v346
        %v348 = vmul.f32 %v344, 1.442695
        %v349 = vpow.pop %v348
        %v350 = vmul.f32 %v345, 1.442695
        %v351 = vpow.pop %v350
        %v352 = vadd.f32 %v347, 1.0
        %v353 = vlog2.pop %v352
        %v354 = vmul.f32 %v353, 0.6931472
        %v355 = vmul.f32 -0.5, %v347
        %v356 = vadd.f32 %v355, 1.0
        %v357 = vmul.f32 %v356, %v347
        %v358 = vand.u32 2147483647, %v347
        %vm359 = vcmp.lt.f32.partialorder %v358, 0.0004427343
        %v360 = vsel %vm359, %v357, %v354
        %v361 = vadd.f32 %v349, 1.0
        %v362 = vlog2.pop %v361
        %v363 = vmul.f32 %v362, 0.6931472
        %v364 = vmul.f32 -0.5, %v349
        %v365 = vadd.f32 %v364, 1.0
        %v366 = vmul.f32 %v365, %v349
        %v367 = vand.u32 2147483647, %v349
        %vm368 = vcmp.lt.f32.partialorder %v367, 0.0004427343
        %v369 = vsel %vm368, %v366, %v363
        %v370 = vadd.f32 %v351, 1.0
        %v371 = vlog2.pop %v370
        %v372 = vmul.f32 %v371, 0.6931472
        %v373 = vmul.f32 -0.5, %v351
        %v374 = vadd.f32 %v373, 1.0
        %v375 = vmul.f32 %v374, %v351
        %v376 = vand.u32 2147483647, %v351
        %vm377 = vcmp.lt.f32.partialorder %v376, 0.0004427343
        %v378 = vsel %vm377, %v375, %v372
        %v379 = vadd.f32 %v337, %v360
        %v380 = vadd.f32 %v338, %v369
        %v381 = vadd.f32 %v339, %v378
        %v385 = vlaneseq
        %v386 = vshrl.u32 %v385, 7
        %v387 = vsub.s32 0, %v386
        %v388 = vrot.slane %v379, %v387
        %v389 = vlaneseq
        %v390 = vshrl.u32 %v389, 7
        %v391 = vsub.s32 1, %v390
        %v392 = vrot.slane %v379, %v391
        %v393 = vlaneseq
        %v394 = vshrl.u32 %v393, 7
        %v395 = vsub.s32 0, %v394
        %v396 = vrot.slane %v380, %v395
        %v397 = vlaneseq
        %v398 = vshrl.u32 %v397, 7
        %v399 = vsub.s32 1, %v398
        %v400 = vrot.slane %v380, %v399
        %v401 = vlaneseq
        %v402 = vshrl.u32 %v401, 7
        %v403 = vsub.s32 0, %v402
        %v404 = vrot.slane %v381, %v403
        %v405 = vlaneseq
        %v406 = vshrl.u32 %v405, 7
        %v407 = vsub.s32 1, %v406
        %v408 = vrot.slane %v381, %v407
        %vm415 = vcmask 1040384
        %v416 = vsel %vm415, %v388, 0.0
        %v417 = vsel %vm415, %v392, 0.0
        %v418 = vadd.f32 %v416, %v417
        %419 = vadd.xlane.f32.xlu0 %v418
        %v420 = vpop.xlane.xlu0 %419
        %v421 = vsel %vm415, %v396, 0.0
        %v422 = vsel %vm415, %v400, 0.0
        %v423 = vadd.f32 %v421, %v422
        %424 = vadd.xlane.f32.xlu0 %v423
        %v425 = vpop.xlane.xlu0 %424
        %v426 = vsel %vm415, %v404, 0.0
        %v427 = vsel %vm415, %v408, 0.0
        %v428 = vadd.f32 %v426, %v427
        %429 = vadd.xlane.f32.xlu0 %v428
        %v430 = vpop.xlane.xlu0 %429
        %v431 = vld [vmem:[#allocation2] sm:$0x7]
        %v432 = vadd.f32 %v420, 0.0
        %v433 = vadd.f32 %v425, 0.0
        %v434 = vadd.f32 %v430, 0.0
        %v438 = vrot.slane %v433, 7
        %vm439 = vcmask 1041409
        %v440 = vsel %vm439, %v438, %v432
        %v441 = vrot.slane %v434, 6
        %vm442 = vcmask 1042434
        %v443 = vsel %vm442, %v441, %v440
        %v445 = vadd.f32 %v431, %v443
        %vm446 = vcmask 2048
        %447 = vst.msk [vmem:[#allocation2] sm:$0x7] %vm446, %v445
        // Predicated region
        $region49: #{tpu_custom_call.1} parent=39 // pred_check
          %p448 = pneg %p321
        $region50: #{tpu_custom_call.1} parent=39 // pred_check_branch
          %450 = sbr.rel (%p448) target = $region52
        $region51: #{tpu_custom_call.1} parent=39 // pred_region
          %s451 = sld [smem:[#allocation3]]
          %s452 = sld [smem:[#allocation3 + $0x1]]
          %v453 = vld [vmem:[#allocation2] sm:$0x7]
          %v454 = vrcp.pop 256.0
          %s455 = vtos %v454
          %s456 = smul.f32 %s451, %s455
          %v457 = vstv %s456
          %v458 = vmul.f32 %v453, %v457
          %v459 = vld [vmem:[%s317] sm:$0x7]
          %v460 = vld [vmem:[%s320] sm:$0x1]
          %v462 = vlaneseq
          %v463 = vshrl.u32 %v462, 7
          %v464 = vsub.s32 0, %v463
          %v465 = vrot.slane %v460, %v464
          %v467 = vsub.f32 %v459, %v465
          %v468 = vmul.f32 %v467, %v467
          %vm469 = vcmask 256000
          %v470 = vsel %vm469, %v468, 0.0
          %471 = vadd.xlane.f32.xlu0 %v470
          %v472 = vpop.xlane.xlu0 %471
          %v473 = vrcp.pop 32.0
          %v474 = vmul.f32 %v472, %v473
          %v475 = vstv %s452
          %v476 = vmul.f32 %v474, %v475
          %v477 = vadd.f32 %v458, %v476
          %v478 = vsel %vm446, %v477, inf
          %v479 = vrot.slane %v478, 4
          %v480 = vmin.f32 %v478, %v479
          %v481 = vrot.slane %v480, 2
          %v482 = vmin.f32 %v480, %v481
          %v483 = vrot.slane %v482, 1
          %v484 = vmin.f32 %v482, %v483
          %v485 = vlaneseq
          %v486 = vshrl.u32 %v485, 7
          %vm487 = vcmp.le.f32.partialorder %v477, %v484
          %v488 = vsel %vm487, %v486, 3
          %v489 = vsel %vm446, %v488, 2147483647
          %v490 = vrot.slane %v489, 4
          %vm491 = vcmp.lt.s32.totalorder %v489, %v490
          %v492 = vsel %vm491, %v489, %v490
          %v493 = vrot.slane %v492, 2
          %vm494 = vcmp.lt.s32.totalorder %v492, %v493
          %v495 = vsel %vm494, %v492, %v493
          %v496 = vrot.slane %v495, 1
          %vm497 = vcmp.lt.s32.totalorder %v495, %v496
          %v498 = vsel %vm497, %v495, %v496
          %vm499 = vcmp.eq.s32.totalorder %v486, %v498
          %v500 = vsel %vm499, 1, 0
          %v501 = vcvt.s32.f32 %v500
          %v502 = vmul.f32 %v458, %v501
          %v503 = vsel %vm446, %v502, 0.0
          %v504 = vrot.slane %v503, 4
          %v505 = vadd.f32 %v503, %v504
          %v506 = vrot.slane %v505, 2
          %v507 = vadd.f32 %v505, %v506
          %v508 = vrot.slane %v507, 1
          %v509 = vadd.f32 %v507, %v508
          %v510 = vmul.f32 %v476, %v501
          %v511 = vsel %vm446, %v510, 0.0
          %v512 = vrot.slane %v511, 4
          %v513 = vadd.f32 %v511, %v512
          %v514 = vrot.slane %v513, 2
          %v515 = vadd.f32 %v513, %v514
          %v516 = vrot.slane %v515, 1
          %v517 = vadd.f32 %v515, %v516
          %v518 = vlaneseq
          %v519 = vand.u32 %v518, 127
          %vm520 = vcmp.eq.s32.totalorder %v519, 0
          %522 = vset.pattern.permute.xlu0 0
          %523 = vperm.xlu0 %522, %v484
          %v524 = vpop.permute.xlu0 %523
          %v526 = vsel %vm520, %v524, 0.0
          %vm527 = vcmp.eq.s32.totalorder %v519, 1
          %529 = vset.pattern.permute.xlu0 0
          %530 = vperm.xlu0 %529, %v509
          %v531 = vpop.permute.xlu0 %530
          %v533 = vsel %vm527, %v531, 0.0
          %v534 = vadd.f32 %v526, %v533
          %vm535 = vcmp.eq.s32.totalorder %v519, 2
          %537 = vset.pattern.permute.xlu0 0
          %538 = vperm.xlu0 %537, %v517
          %v539 = vpop.permute.xlu0 %538
          %v541 = vsel %vm535, %v539, 0.0
          %v542 = vadd.f32 %v534, %v541
          %vm543 = vcmask 16384
          %544 = vst.msk [vmem:[%s297] sm:$0x1] %vm543, %v542
        $region52: #{tpu_custom_call.1} parent=39 // pred_fallthru
          _
        %s545 = sand.u32 %s169, 1
        %s546 = scalar_lea.sflag [#allocation4], %s545
        %s547 = sand.u32 %s169, 1
        %s548 = scalar_lea.vmem [#allocation6], %s547
        // Predicated region
        $region53: #{tpu_custom_call.1} parent=39 // pred_check
          %p549 = pneg %p179
        $region54: #{tpu_custom_call.1} parent=39 // pred_check_branch
          %551 = sbr.rel (%p549) target = $region56
        $region55: #{tpu_custom_call.1} parent=39 // pred_region
          %s553 = ssub.s32 16, 16
          %554 = vsyncadd %s546, %s553
          %s555 = smul.addr %s24, 16
          %s556 = scalar_lea.hbm %s5, %s555
          %s558 = sshll.u32 %s548, 4
          %s559 = int_to_ptr.vmem [resolvable:$true] %s558
          %561 = dma.vmem_to_hbm [thread:$0]  %s559, 16, %s556, %s546
        $region56: #{tpu_custom_call.1} parent=39 // pred_fallthru
          _
      $region40: #{tpu_custom_call.1} parent=5 // pred_fallthru
        _
      %p562 = scmp.le.s32.totalorder 2, %s15
      // Predicated region
      $region57: #{tpu_custom_call.1} parent=5 // pred_check
        %p563 = pneg %p562
      $region58: #{tpu_custom_call.1} parent=5 // pred_check_branch
        %565 = sbr.rel (%p563) target = $region60
      $region59: #{tpu_custom_call.1} parent=5 // pred_region
        %s566 = ssub.s32 %s15, 2
        // Predicated region
        $region61: #{tpu_custom_call.1} parent=59 // pred_check
          %p567 = pneg %p185
        $region62: #{tpu_custom_call.1} parent=59 // pred_check_branch
          %569 = sbr.rel (%p567) target = $region64
        $region63: #{tpu_custom_call.1} parent=59 // pred_region
          %s570 = sand.u32 %s170, 1
          %s571 = scalar_lea.sflag [#allocation4], %s570
          %s572 = sand.u32 %s170, 1
          %s573 = scalar_lea.vmem [#allocation6], %s572
          %574 = dma.done %s571, 16
        $region64: #{tpu_custom_call.1} parent=59 // pred_fallthru
          _
      $region60: #{tpu_custom_call.1} parent=5 // pred_fallthru
        _
    $region6: #{tpu_custom_call.1} parent=1 // loop_footer
      %s19 = sadd.s32 1, %s15
    $region7: #{tpu_custom_call.1} parent=1 // loop_footer_branch
      %14 = sbr.rel target = $region3
    $region8: #{tpu_custom_call.1} parent=1 // loop_exit
      _
    %575 = vsyncpa [#allocation4], 1
    %s576 = scalar_lea.sflag [#allocation4], 1
    %577 = vsyncpa %s576, 1
    %578 = vsyncpa [#allocation5], 1
    %s579 = scalar_lea.sflag [#allocation5], 1
    %580 = vsyncpa %s579, 1

</llo_original>
